<compile_context>
chip_gen: v6e
topology: v6e:2x2x1
jax: 0.10.0
libtpu: 0.0.40
codegen_flags: <defaults>
</compile_context>

<pallas_src>
import jax
import jax.numpy as jnp
from jax.experimental import pallas as pl
from jax.experimental.pallas import tpu as pltpu

SQRT_2_OVER_PI = 0.7978845608028654
GELU_C2 = 0.044715 * SQRT_2_OVER_PI  # 0.0356774081363...


def conv_gelu_kernel(x_ref, t_ref, out_ref):
    # Single MXU matmul (bf16 x bf16 -> f32 accumulate): (B, 128) @ (128, 384).
    # Bias is already folded into row 96 of T (x column 96 is 1.0).
    v1 = jnp.dot(x_ref[...].astype(jnp.bfloat16), t_ref[...],
                 preferred_element_type=jnp.float32)
    # tanh-GELU with folded constants, all in f32 on the VPU/EUP:
    #   inner = v1*(c1 + c2*v1^2);  out = 0.5*v1*(1 + tanh(inner))
    inner = v1 * (SQRT_2_OVER_PI + GELU_C2 * (v1 * v1))
    out_ref[...] = (0.5 * v1) * (1.0 + jnp.tanh(inner))


def init_conv_gelu_params(weight, bias, H, W, pad_h):
    """Fold Conv2d(pad=(pad_h,0), stride=1, KW==W) + bias into one bf16 matrix.

    Returns T_full of shape (Kp=128, Np=384), bf16, where
      rows 0..95   : Toeplitz conv weights (out = x_flat @ T)
      row  96      : bias (replicated per Hout), activated by a 1.0 in x
      rows 97..127 : zero (x padding values there are irrelevant)
    Built once at init; static per model.
    """
    OC, C, KH, KW = weight.shape
    assert KW == W, "folding assumes the kernel spans the full width"
    Hout = H + 2 * pad_h - KH + 1
    K = C * H * W                               # 96
    Kp = ((K + 1 + 127) // 128) * 128           # 128 (room for the bias row)
    N = OC * Hout                               # 351
    Np = ((N + 127) // 128) * 128               # 384 (lane-dense output width)

    # A[h, kh, oh] = 1 iff padded-row index oh+kh maps to input row h.
    h_idx = jnp.arange(H)[:, None, None]
    kh_idx = jnp.arange(KH)[None, :, None]
    oh_idx = jnp.arange(Hout)[None, None, :]
    A = (oh_idx + kh_idx - pad_h == h_idx).astype(jnp.float32)   # (H, KH, Hout)

    # T5[c, h, w, oc, oh] = sum_kh weight[oc, c, kh, w] * A[h, kh, oh]
    T5 = jnp.einsum('ockw,hkq->chwoq', weight.astype(jnp.float32), A)
    T = T5.reshape(K, N)

    # Bias row laid out as [oc*Hout + oh] = bias[oc].
    b_row = jnp.repeat(bias.astype(jnp.float32), Hout)           # (N,)

    T_full = jnp.zeros((Kp, Np), jnp.float32)
    T_full = T_full.at[:K, :N].set(T)
    T_full = T_full.at[K, :N].set(b_row)
    return T_full.astype(jnp.bfloat16), Hout, K, Kp, N, Np


def make_conv2d_gelu(t_full, OC, Hout, K, Kp, N, Np):
    """Returns a jitted forward: (B, C, H, W) NCHW -> (B, OC, Hout, 1) NCHW."""

    @jax.jit
    def fwd(x):
        B = x.shape[0]
        x2d = x.reshape(B, K).astype(jnp.float32)        # free reshape (contiguous)
        # Pad contraction dim to 128 with ONES: column K (=96) activates the
        # bias row of T; columns K+1..127 hit zero rows, so ones are harmless.
        x2d = jnp.pad(x2d, ((0, 0), (0, Kp - K)), constant_values=1.0)

        out2d = pl.pallas_call(
            conv_gelu_kernel,
            out_shape=jax.ShapeDtypeStruct((B, Np), jnp.float32),
            in_specs=[
                pl.BlockSpec(memory_space=pltpu.MemorySpace.VMEM),
                pl.BlockSpec(memory_space=pltpu.MemorySpace.VMEM),
            ],
            out_specs=pl.BlockSpec(memory_space=pltpu.MemorySpace.VMEM),
        )(x2d, t_full)

        # Lane-dense (B, 384) -> slice valid columns -> NCHW (B, OC, Hout, 1).
        return out2d[:, :N].reshape(B, OC, Hout, 1)

    return fwd


def _reference(x, weight, bias):
    v1 = jax.lax.conv_general_dilated(
        x, weight, window_strides=(1, 1), padding=((6, 6), (0, 0)),
        dimension_numbers=('NCHW', 'OIHW', 'NCHW')) + bias[None, :, None, None]
    return 0.5 * v1 * (1.0 + jnp.tanh(SQRT_2_OVER_PI * (v1 + 0.044715 * v1 * v1 * v1)))


if __name__ == "__main__":
    key = jax.random.PRNGKey(0)
    kx, kw, kb = jax.random.split(key, 3)

    B, C, H, W = 2, 6, 4, 4
    OC, KH, KW = 27, 4, 4
    x1 = jax.random.normal(kx, (B, C, H, W), dtype=jnp.float32)

    # Deterministic Conv2d-style init (uniform in +/- 1/sqrt(fan_in)).
    fan_in = C * KH * KW
    bound = 1.0 / (fan_in ** 0.5)
    weight = jax.random.uniform(kw, (OC, C, KH, KW), jnp.float32, -bound, bound)
    bias = jax.random.uniform(kb, (OC,), jnp.float32, -bound, bound)

    # One-time parameter folding (outside the hot path).
    t_full, Hout, K, Kp, N, Np = init_conv_gelu_params(weight, bias, H, W, pad_h=6)
    conv2d_gelu = make_conv2d_gelu(t_full, OC, Hout, K, Kp, N, Np)

    out = jax.block_until_ready(conv2d_gelu(x1))

    ref = _reference(x1, weight, bias)
    assert out.shape == (B, OC, Hout, 1), out.shape
    # Tolerance relaxed vs the pure-f32 version: the matmul operands are bf16
    # (f32 accumulation), per the MXU-oriented performance feedback.
    assert jnp.allclose(out, ref, atol=3e-2, rtol=3e-2), \
        float(jnp.max(jnp.abs(out - ref)))

    print("KERNEL_OK")
</pallas_src>

<mosaic_0001>
module attributes {stable_mosaic.version = 11 : i64} {
  func.func @conv_gelu_kernel(%arg0: memref<2x128xf32, #tpu.memory_space<vmem>>, %arg1: memref<128x384xbf16, #tpu.memory_space<vmem>>, %arg2: memref<2x384xf32, #tpu.memory_space<vmem>>) attributes {dimension_semantics = [], scalar_prefetch = 0 : i64, scratch_operands = 0 : i64, tpu.core_type = #tpu.core_type<tc>} {
    %c0 = arith.constant 0 : index
    %c0_0 = arith.constant 0 : index
    %0 = vector.load %arg0[%c0, %c0_0] : memref<2x128xf32, #tpu.memory_space<vmem>>, vector<2x128xf32>
    %1 = arith.truncf %0 : vector<2x128xf32> to vector<2x128xbf16>
    %c0_1 = arith.constant 0 : index
    %c0_2 = arith.constant 0 : index
    %2 = vector.load %arg1[%c0_1, %c0_2] : memref<128x384xbf16, #tpu.memory_space<vmem>>, vector<128x384xbf16>
    %cst = arith.constant dense<0.000000e+00> : vector<2x384xf32>
    %3 = tpu.matmul %1, %2, %cst {dimension_numbers = #tpu.dot_dimension_numbers<[1], [0], [0], [1], [0, 0, 1, 1], [], []>} : vector<2x128xbf16>, vector<128x384xbf16>, vector<2x384xf32> -> vector<2x384xf32>
    %4 = arith.mulf %3, %3 : vector<2x384xf32>
    %cst_3 = arith.constant 0.0356774069 : f32
    %5 = vector.broadcast %cst_3 : f32 to vector<2x384xf32>
    %6 = arith.mulf %5, %4 : vector<2x384xf32>
    %cst_4 = arith.constant 0.797884583 : f32
    %7 = vector.broadcast %cst_4 : f32 to vector<2x384xf32>
    %8 = arith.addf %7, %6 : vector<2x384xf32>
    %9 = arith.mulf %3, %8 : vector<2x384xf32>
    %cst_5 = arith.constant 5.000000e-01 : f32
    %10 = vector.broadcast %cst_5 : f32 to vector<2x384xf32>
    %11 = arith.mulf %10, %3 : vector<2x384xf32>
    %12 = math.tanh %9 : vector<2x384xf32>
    %cst_6 = arith.constant 1.000000e+00 : f32
    %13 = vector.broadcast %cst_6 : f32 to vector<2x384xf32>
    %14 = arith.addf %13, %12 : vector<2x384xf32>
    %15 = arith.mulf %11, %14 : vector<2x384xf32>
    %c0_7 = arith.constant 0 : index
    %c0_8 = arith.constant 0 : index
    %16 = vector.load %arg2[%c0_7, %c0_8] : memref<2x384xf32, #tpu.memory_space<vmem>>, vector<2x384xf32>
    tpu.vector_store %arg2[%c0_7, %c0_8], %15 {strides = array<i32>} : memref<2x384xf32, #tpu.memory_space<vmem>>, vector<2x384xf32>,
    return
  }
}

</mosaic_0001>

<llo_original>
// kernel: fwd.1
$region0: #{fwd.1}
  #allocation0 [shape = 'u32[]', space=smem, size = 0x4, offset = 0x4, fixed_abs, tag = 'smem constant byte address 0x4 - core index']
  #allocation1 [shape = 'u32[144,128]{1,0:T(1,128)}', space=vmem, size = 0x12000, scoped, tag = 'internal scratch']
  %s0 = inlined_call_operand.vmem [shape: f32[2,128], index: 0, kind: input, shape index: {}]
  %s1 = inlined_call_operand.hbm [shape: bf16[128,384], index: 1, kind: input, shape index: {}]
  %s2 = inlined_call_operand.vmem [shape: f32[2,384], index: 2, kind: output, shape index: {}]
  %s3 = sld [smem:[#allocation0]]
  $region22: #{fwd.1} parent=0
    _
  %s5 = ssub.s32 1, %s3
  %s6 = scalar_select 0, %s5, %s3
  $region1: #{fwd.1} parent=0
    #allocation2 [shape = 'u8[98304]{0}', space=vmem, size = 0x18000, scoped, tag = 'input window, operand 1, single buffered']
    #allocation3 [shape = 's32[1]{0}', space=sflag, size = 0x4, scoped, tag = 'scoped memory for fwd.1']
    %7 = vsyncpa [#allocation3], 0
    // Predicated region
    $region2: #{fwd.1} parent=1 // pred_check
      _
    $region3: #{fwd.1} parent=1 // pred_check_branch
      %9 = sbr.rel (0) target = $region5
    $region4: #{fwd.1} parent=1 // pred_region
      _
    $region5: #{fwd.1} parent=1 // pred_fallthru
      _
    // Predicated region
    $region6: #{fwd.1} parent=1 // pred_check
      _
    $region7: #{fwd.1} parent=1 // pred_check_branch
      %11 = sbr.rel (0) target = $region9
    $region8: #{fwd.1} parent=1 // pred_region
      %s13 = ssub.s32 3072, 3072
      %14 = vsyncadd [#allocation3], %s13
      %s15 = sshll.u32 [#allocation2], 4
      %s16 = int_to_ptr.vmem [resolvable:$true] %s15
      %21 = dma.hbm_to_vmem [thread:$0]  %s1, 3072, %s16, [#allocation3], 192, 192, 12
    $region9: #{fwd.1} parent=1 // pred_fallthru
      _
    // Predicated region
    $region10: #{fwd.1} parent=1 // pred_check
      _
    $region11: #{fwd.1} parent=1 // pred_check_branch
      %23 = sbr.rel (0) target = $region13
    $region12: #{fwd.1} parent=1 // pred_region
      %24 = dma.done [#allocation3], 3072
    $region13: #{fwd.1} parent=1 // pred_fallthru
      _
    %v26 = vld [vmem:[%s0] sm:$0x3]
    %v27 = vpack.c.bf16 %v26, %v26
    %v28 = vld [vmem:[#allocation2] sm:$0xff]
    %v29 = vld [vmem:[#allocation2 + $0x8] sm:$0xf]
    %v30 = vld [vmem:[#allocation2 + $0xc] sm:$0xff]
    %v31 = vld [vmem:[#allocation2 + $0x14] sm:$0xf]
    %v32 = vld [vmem:[#allocation2 + $0x18] sm:$0xff]
    %v33 = vld [vmem:[#allocation2 + $0x20] sm:$0xf]
    %v34 = vld [vmem:[#allocation2 + $0x24] sm:$0xff]
    %v35 = vld [vmem:[#allocation2 + $0x2c] sm:$0xf]
    %v36 = vld [vmem:[#allocation2 + $0x30] sm:$0xff]
    %v37 = vld [vmem:[#allocation2 + $0x38] sm:$0xf]
    %v38 = vld [vmem:[#allocation2 + $0x3c] sm:$0xff]
    %v39 = vld [vmem:[#allocation2 + $0x44] sm:$0xf]
    %v40 = vld [vmem:[#allocation2 + $0x48] sm:$0xff]
    %v41 = vld [vmem:[#allocation2 + $0x50] sm:$0xf]
    %v42 = vld [vmem:[#allocation2 + $0x54] sm:$0xff]
    %v43 = vld [vmem:[#allocation2 + $0x5c] sm:$0xf]
    %v44 = vld [vmem:[#allocation2 + $0x60] sm:$0xff]
    %v45 = vld [vmem:[#allocation2 + $0x68] sm:$0xf]
    %v46 = vld [vmem:[#allocation2 + $0x6c] sm:$0xff]
    %v47 = vld [vmem:[#allocation2 + $0x74] sm:$0xf]
    %v48 = vld [vmem:[#allocation2 + $0x78] sm:$0xff]
    %v49 = vld [vmem:[#allocation2 + $0x80] sm:$0xf]
    %v50 = vld [vmem:[#allocation2 + $0x84] sm:$0xff]
    %v51 = vld [vmem:[#allocation2 + $0x8c] sm:$0xf]
    %v52 = vld [vmem:[#allocation2 + $0x90] sm:$0xff]
    %v53 = vld [vmem:[#allocation2 + $0x98] sm:$0xf]
    %v54 = vld [vmem:[#allocation2 + $0x9c] sm:$0xff]
    %v55 = vld [vmem:[#allocation2 + $0xa4] sm:$0xf]
    %v56 = vld [vmem:[#allocation2 + $0xa8] sm:$0xff]
    %v57 = vld [vmem:[#allocation2 + $0xb0] sm:$0xf]
    %v58 = vld [vmem:[#allocation2 + $0xb4] sm:$0xff]
    %v59 = vld [vmem:[#allocation2 + $0xbc] sm:$0xf]
    %v92 = vunpack.c.l.b16 %v28
    %v93 = vunpack.c.h.b16 %v28
    %v94 = vunpack.c.l.b16 %v29
    %v95 = vunpack.c.l.b16 %v30
    %v96 = vunpack.c.h.b16 %v30
    %v97 = vunpack.c.l.b16 %v31
    %v98 = vunpack.c.l.b16 %v32
    %v99 = vunpack.c.h.b16 %v32
    %v100 = vunpack.c.l.b16 %v33
    %v101 = vunpack.c.l.b16 %v34
    %v102 = vunpack.c.h.b16 %v34
    %v103 = vunpack.c.l.b16 %v35
    %v104 = vunpack.c.l.b16 %v36
    %v105 = vunpack.c.h.b16 %v36
    %v106 = vunpack.c.l.b16 %v37
    %v107 = vunpack.c.l.b16 %v38
    %v108 = vunpack.c.h.b16 %v38
    %v109 = vunpack.c.l.b16 %v39
    %v110 = vunpack.c.l.b16 %v40
    %v111 = vunpack.c.h.b16 %v40
    %v112 = vunpack.c.l.b16 %v41
    %v113 = vunpack.c.l.b16 %v42
    %v114 = vunpack.c.h.b16 %v42
    %v115 = vunpack.c.l.b16 %v43
    %v116 = vunpack.c.l.b16 %v44
    %v117 = vunpack.c.h.b16 %v44
    %v118 = vunpack.c.l.b16 %v45
    %v119 = vunpack.c.l.b16 %v46
    %v120 = vunpack.c.h.b16 %v46
    %v121 = vunpack.c.l.b16 %v47
    %v122 = vunpack.c.l.b16 %v48
    %v123 = vunpack.c.h.b16 %v48
    %v124 = vunpack.c.l.b16 %v49
    %v125 = vunpack.c.l.b16 %v50
    %v126 = vunpack.c.h.b16 %v50
    %v127 = vunpack.c.l.b16 %v51
    %v128 = vunpack.c.l.b16 %v52
    %v129 = vunpack.c.h.b16 %v52
    %v130 = vunpack.c.l.b16 %v53
    %v131 = vunpack.c.l.b16 %v54
    %v132 = vunpack.c.h.b16 %v54
    %v133 = vunpack.c.l.b16 %v55
    %v134 = vunpack.c.l.b16 %v56
    %v135 = vunpack.c.h.b16 %v56
    %v136 = vunpack.c.l.b16 %v57
    %v137 = vunpack.c.l.b16 %v58
    %v138 = vunpack.c.h.b16 %v58
    %v139 = vunpack.c.l.b16 %v59
    %v140 = vpack.c.b16 %v95, %v92
    %v141 = vpack.c.b16 %v96, %v93
    %v142 = vpack.c.b16 %v97, %v94
    %v143 = vpack.c.b16 %v101, %v98
    %v144 = vpack.c.b16 %v102, %v99
    %v145 = vpack.c.b16 %v103, %v100
    %v146 = vpack.c.b16 %v107, %v104
    %v147 = vpack.c.b16 %v108, %v105
    %v148 = vpack.c.b16 %v109, %v106
    %v149 = vpack.c.b16 %v113, %v110
    %v150 = vpack.c.b16 %v114, %v111
    %v151 = vpack.c.b16 %v115, %v112
    %v152 = vpack.c.b16 %v119, %v116
    %v153 = vpack.c.b16 %v120, %v117
    %v154 = vpack.c.b16 %v121, %v118
    %v155 = vpack.c.b16 %v125, %v122
    %v156 = vpack.c.b16 %v126, %v123
    %v157 = vpack.c.b16 %v127, %v124
    %v158 = vpack.c.b16 %v131, %v128
    %v159 = vpack.c.b16 %v132, %v129
    %v160 = vpack.c.b16 %v133, %v130
    %v161 = vpack.c.b16 %v137, %v134
    %v162 = vpack.c.b16 %v138, %v135
    %v163 = vpack.c.b16 %v139, %v136
    %188 = vmatprep.subr.bf16.mxu0 %v162
    %189 = vmatpush1.bf16.msra.mxu0 %v161
    %190 = vmatprep.subr.bf16.mxu0 %v159
    %191 = vmatpush1.bf16.msra.mxu0 %v158
    %192 = vmatprep.subr.bf16.mxu0 %v156
    %193 = vmatpush1.bf16.msra.mxu0 %v155
    %194 = vmatprep.subr.bf16.mxu0 %v153
    %195 = vmatpush1.bf16.msra.mxu0 %v152
    %196 = vmatprep.subr.bf16.mxu0 %v150
    %197 = vmatpush1.bf16.msra.mxu0 %v149
    %198 = vmatprep.subr.bf16.mxu0 %v147
    %199 = vmatpush1.bf16.msra.mxu0 %v146
    %200 = vmatprep.subr.bf16.mxu0 %v144
    %201 = vmatpush1.bf16.msra.mxu0 %v143
    %202 = vmatprep.subr.bf16.mxu0 %v141
    %203 = vmatpush1.bf16.msra.mxu0 %v140
    %204 = vmatprep.subr.bf16.mxu0 0
    %205 = vmatpush2.bf16.msra.mxu0 0
    %206 = vmatprep.subr.bf16.mxu0 0
    %207 = vmatpush2.bf16.msra.mxu0 0
    %208 = vmatprep.subr.bf16.mxu0 0
    %209 = vmatpush2.bf16.msra.mxu0 0
    %210 = vmatprep.subr.bf16.mxu0 0
    %211 = vmatpush2.bf16.msra.mxu0 0
    %212 = vmatprep.subr.bf16.mxu0 0
    %213 = vmatpush2.bf16.msra.mxu0 0
    %214 = vmatprep.subr.bf16.mxu0 0
    %215 = vmatpush2.bf16.msra.mxu0 0
    %216 = vmatprep.subr.bf16.mxu0 0
    %217 = vmatpush2.bf16.msra.mxu0 0
    %218 = vmatprep.subr.bf16.mxu0 0
    %219 = vmatpush2.bf16.msra.mxu0 0
    %220 = vmatprep.mubr.bf16.mxu0 0
    %221 = vmatmul.mubr.bf16.gmra.mxu0 %v27
    %v222 = vpop.f32.mrf.mxu0
    %v223 = vadd.f32 0.0, %v222
    %v224 = vpop.f32.mrf.mxu0
    %v225 = vadd.f32 0.0, %v224
    %v226 = vpop.f32.mrf.mxu0
    %v227 = vpop.f32.mrf.mxu0
    %228 = vdwg.mxu0
    %229 = vmatprep.subr.bf16.mxu0 0
    %230 = vmatpush1.bf16.msra.mxu0 %v163
    %231 = vmatprep.subr.bf16.mxu0 0
    %232 = vmatpush1.bf16.msra.mxu0 %v160
    %233 = vmatprep.subr.bf16.mxu0 0
    %234 = vmatpush1.bf16.msra.mxu0 %v157
    %235 = vmatprep.subr.bf16.mxu0 0
    %236 = vmatpush1.bf16.msra.mxu0 %v154
    %237 = vmatprep.subr.bf16.mxu0 0
    %238 = vmatpush1.bf16.msra.mxu0 %v151
    %239 = vmatprep.subr.bf16.mxu0 0
    %240 = vmatpush1.bf16.msra.mxu0 %v148
    %241 = vmatprep.subr.bf16.mxu0 0
    %242 = vmatpush1.bf16.msra.mxu0 %v145
    %243 = vmatprep.subr.bf16.mxu0 0
    %244 = vmatpush1.bf16.msra.mxu0 %v142
    %245 = vmatprep.subr.bf16.mxu0 0
    %246 = vmatpush2.bf16.msra.mxu0 0
    %247 = vmatprep.subr.bf16.mxu0 0
    %248 = vmatpush2.bf16.msra.mxu0 0
    %249 = vmatprep.subr.bf16.mxu0 0
    %250 = vmatpush2.bf16.msra.mxu0 0
    %251 = vmatprep.subr.bf16.mxu0 0
    %252 = vmatpush2.bf16.msra.mxu0 0
    %253 = vmatprep.subr.bf16.mxu0 0
    %254 = vmatpush2.bf16.msra.mxu0 0
    %255 = vmatprep.subr.bf16.mxu0 0
    %256 = vmatpush2.bf16.msra.mxu0 0
    %257 = vmatprep.subr.bf16.mxu0 0
    %258 = vmatpush2.bf16.msra.mxu0 0
    %259 = vmatprep.subr.bf16.mxu0 0
    %260 = vmatpush2.bf16.msra.mxu0 0
    %261 = vmatprep.mubr.bf16.mxu0 0
    %262 = vmatmul.mubr.bf16.gmra.mxu0 %v27
    %v263 = vpop.f32.mrf.mxu0
    %v264 = vadd.f32 0.0, %v263
    %v265 = vpop.f32.mrf.mxu0
    %v266 = vpop.f32.mrf.mxu0
    %v267 = vpop.f32.mrf.mxu0
    %268 = vdwg.mxu0
    %v269 = vmul.f32 %v223, %v223
    %v270 = vmul.f32 %v225, %v225
    %v271 = vmul.f32 %v264, %v264
    %v272 = vmul.f32 %v269, 0.035677407
    %v273 = vmul.f32 %v270, 0.035677407
    %v274 = vmul.f32 %v271, 0.035677407
    %v275 = vadd.f32 %v272, 0.7978846
    %v276 = vadd.f32 %v273, 0.7978846
    %v277 = vadd.f32 %v274, 0.7978846
    %v278 = vmul.f32 %v223, %v275
    %v279 = vmul.f32 %v225, %v276
    %v280 = vmul.f32 %v264, %v277
    %v281 = vmul.f32 %v223, 0.5
    %v282 = vmul.f32 %v225, 0.5
    %v283 = vmul.f32 %v264, 0.5
    %v284 = vtanh.pop %v278
    %v285 = vtanh.pop %v279
    %v286 = vtanh.pop %v280
    %v287 = vadd.f32 %v284, 1.0
    %v288 = vadd.f32 %v285, 1.0
    %v289 = vadd.f32 %v286, 1.0
    %v290 = vmul.f32 %v281, %v287
    %v291 = vmul.f32 %v282, %v288
    %v292 = vmul.f32 %v283, %v289
    %v296 = vcombine.low %v290, %v291
    %v298 = vunpack.c.l.s4 1983009808
    %v299 = vunpack.c.0.s8 %v298
    %v300 = vlaneseq
    %v301 = vshrl.u32 %v300, 7
    %v302 = vsub.s32 %v299, %v301
    %v303 = vrot.slane %v296, %v302
    %v305 = vunpack.c.l.s4 1983009808
    %v306 = vunpack.c.0.s8 %v305
    %v307 = vlaneseq
    %v308 = vshrl.u32 %v307, 7
    %v309 = vsub.s32 %v306, %v308
    %v310 = vrot.slane %v292, %v309
    %v311 = vcombine.low %v303, %v310
    %313 = vst [vmem:[%s2] sm:$0x3f] %v311
    // Predicated region
    $region14: #{fwd.1} parent=1 // pred_check
      _
    $region15: #{fwd.1} parent=1 // pred_check_branch
      %315 = sbr.rel (0) target = $region17
    $region16: #{fwd.1} parent=1 // pred_region
      _
    $region17: #{fwd.1} parent=1 // pred_fallthru
      _
    // Predicated region
    $region18: #{fwd.1} parent=1 // pred_check
      _
    $region19: #{fwd.1} parent=1 // pred_check_branch
      %317 = sbr.rel (0) target = $region21
    $region20: #{fwd.1} parent=1 // pred_region
      _
    $region21: #{fwd.1} parent=1 // pred_fallthru
      _
    %318 = vsyncpa [#allocation3], 1

</llo_original>
